<compile_context>
chip_gen: v5e
topology: v5e:2x2
jax: 0.10.0
libtpu: 0.0.40
codegen_flags: <defaults>
</compile_context>

<pallas_src>
import functools

import jax
import jax.numpy as jnp
from jax.experimental import pallas as pl
from jax.experimental.pallas import tpu as pltpu


def fsmm_kernel(scal_ref,   # SMEM f32[8]: dq, k0, k1, b2, bf2, pad...
                xT_ref,     # [F, TB]  x transposed (batch on lanes)
                w1_ref,     # [H, F]
                b1_ref,     # [H, 1]
                w2_ref,     # [H, 1]   W2^T
                dcoef_ref,  # [H, 1]   W2^T * W1[:, -1:]
                wf1_ref,    # [H, 1]   Wf1
                bf1_ref,    # [H, 1]
                wf2_ref,    # [H, 1]   Wf2^T
                out_ref):   # [3, TB]  rows: soc, loss1, loss2
    dq = scal_ref[0]     # delta / Q
    k0 = scal_ref[1]     # 1 - 1/(R1*C1)
    k1 = scal_ref[2]     # R0 + 1/C1
    b2 = scal_ref[3]
    bf2 = scal_ref[4]

    xT = xT_ref[...]          # [F, TB]
    w1 = w1_ref[...]          # [H, F]
    b1 = b1_ref[...]          # [H, 1]
    w2 = w2_ref[...]          # [H, 1]
    dcoef = dcoef_ref[...]    # [H, 1]
    wf1 = wf1_ref[...]        # [H, 1]
    bf1 = bf1_ref[...]        # [H, 1]
    wf2 = wf2_ref[...]        # [H, 1]

    n_feat = xT.shape[0]

    # --- first Linear: pre^T = W1 @ x^T + b1 as F broadcast FMAs (VPU).
    pre = b1 + w1[:, 0:1] * xT[0:1, :]                   # [H, TB]
    for f in range(1, n_feat):
        pre = pre + w1[:, f:f + 1] * xT[f:f + 1, :]

    h = jnp.maximum(pre, 0.0)                            # [H, TB]

    # --- soc = W2 @ relu(pre) + b2 : VPU mul + sublane reduce (N=1).
    soc = jnp.sum(h * w2, axis=0, keepdims=True) + b2            # [1, TB]

    # --- analytic d(sum soc)/d x[:, -1] (replaces torch.autograd.grad).
    d_soc = jnp.sum(jnp.where(pre > 0.0, dcoef, 0.0),
                    axis=0, keepdims=True)                       # [1, TB]

    x0 = xT[0:1, :]   # voltage
    x1 = xT[1:2, :]   # current

    # --- loss1 = (delta/Q) * I + d_soc
    loss1 = dq * x1 + d_soc                                      # [1, TB]

    # --- f_soc = Wf2 @ relu(Wf1 @ soc + bf1) + bf2 (K=1 / N=1 -> VPU).
    f1 = jnp.maximum(soc * wf1 + bf1, 0.0)                       # [H, TB]
    f_soc = jnp.sum(f1 * wf2, axis=0, keepdims=True) + bf2       # [1, TB]

    # --- loss2 = f_soc - x0 - R0*x1 - Up, with Up folded into k0/k1.
    loss2 = f_soc - k0 * x0 - k1 * x1                            # [1, TB]

    out_ref[0:1, :] = soc
    out_ref[1:2, :] = loss1
    out_ref[2:3, :] = loss2


def prepare_params(params):
    """One-time layout prep (transposes / reshapes / scalar folding).
    Keep this off the per-forward path."""
    f32 = jnp.float32
    H, F = params["W1"].shape

    W1 = params["W1"].astype(f32)                        # [H, F]
    b1col = params["b1"].reshape(H, 1).astype(f32)       # [H, 1]
    w2col = params["W2"].reshape(H, 1).astype(f32)       # [H, 1]  (W2 is [1,H])
    dcoef = (w2col * W1[:, F - 1:F]).astype(f32)         # [H, 1]
    wf1col = params["Wf1"].reshape(H, 1).astype(f32)     # [H, 1]
    bf1col = params["bf1"].reshape(H, 1).astype(f32)     # [H, 1]
    wf2col = params["Wf2"].reshape(H, 1).astype(f32)     # [H, 1]  (Wf2 is [1,H])

    inv_c1 = 1.0 / params["C1"]
    a = -inv_c1 / params["R1"]                           # Up coefficient
    zero = jnp.float32(0.0)
    scalars = jnp.stack([
        (params["delta"] / params["Q"]).astype(f32),     # dq
        (1.0 + a).astype(f32),                           # k0 = 1 - 1/(R1*C1)
        (params["R0"] + inv_c1).astype(f32),             # k1 = R0 + 1/C1
        params["b2"].reshape(()).astype(f32),
        params["bf2"].reshape(()).astype(f32),
        zero, zero, zero,
    ])
    return dict(W1=W1, b1col=b1col, w2col=w2col, dcoef=dcoef,
                wf1col=wf1col, bf1col=bf1col, wf2col=wf2col,
                scalars=scalars)


@functools.partial(jax.jit, static_argnames=("block_b",))
def fsmm_mlp_forward(x, prep, block_b=1024):
    B, F = x.shape
    H = prep["W1"].shape[0]
    f32 = jnp.float32

    xT = x.astype(f32).T                                 # [F, B], batch on lanes

    # Batch tile along the lane axis; pad B up if needed.
    if B <= block_b:
        tb = B
        b_pad = B
    else:
        tb = block_b
        b_pad = ((B + tb - 1) // tb) * tb
        if b_pad != B:
            xT = jnp.pad(xT, ((0, 0), (0, b_pad - B)))
    grid = (b_pad // tb,)

    col = lambda i: (0, 0)   # resident weight blocks
    out = pl.pallas_call(
        fsmm_kernel,
        out_shape=jax.ShapeDtypeStruct((3, b_pad), f32),
        grid=grid,
        in_specs=[
            pl.BlockSpec(memory_space=pltpu.MemorySpace.SMEM),  # scalars
            pl.BlockSpec((F, tb), lambda i: (0, i)),            # x^T
            pl.BlockSpec((H, F), col),                          # W1
            pl.BlockSpec((H, 1), col),                          # b1
            pl.BlockSpec((H, 1), col),                          # W2^T
            pl.BlockSpec((H, 1), col),                          # dcoef
            pl.BlockSpec((H, 1), col),                          # Wf1
            pl.BlockSpec((H, 1), col),                          # bf1
            pl.BlockSpec((H, 1), col),                          # Wf2^T
        ],
        out_specs=pl.BlockSpec((3, tb), lambda i: (0, i)),
        compiler_params=pltpu.CompilerParams(
            dimension_semantics=("parallel",)),
    )(prep["scalars"], xT, prep["W1"], prep["b1col"], prep["w2col"],
      prep["dcoef"], prep["wf1col"], prep["bf1col"], prep["wf2col"])

    out = out[:, :B]
    soc = out[0:1, :].T        # [B, 1]
    loss1 = out[1:2, :].T      # [B, 1]
    loss2 = out[2:3, :].T      # [B, 1]
    return soc, loss1, loss2


def fsmm_mlp_reference(x, params):
    """Pure-JAX reference (mirrors the PyTorch forward semantics)."""
    W1, b1 = params["W1"], params["b1"]
    W2, b2 = params["W2"], params["b2"]
    Wf1, bf1 = params["Wf1"], params["bf1"]
    Wf2, bf2 = params["Wf2"], params["bf2"]
    Q, delta = params["Q"], params["delta"]
    R0, R1, C1 = params["R0"], params["R1"], params["C1"]

    pre = x @ W1.T + b1
    h = jnp.maximum(pre, 0.0)
    soc = h @ W2.T + b2
    d_soc = ((pre > 0.0).astype(x.dtype) * W2 * W1[:, -1][None, :]).sum(-1, keepdims=True)
    loss1 = (delta / Q) * x[:, 1:2] + d_soc
    f_soc = jnp.maximum(soc @ Wf1.T + bf1, 0.0) @ Wf2.T + bf2
    Up = (-1.0 / (R1 * C1)) * x[:, 0:1] + (1.0 / C1) * x[:, 1:2]
    loss2 = f_soc - x[:, 0:1] - R0 * x[:, 1:2] - Up
    return soc, loss1, loss2


def init_params(key, input_size, hidden_size):
    """Deterministic synthetic init (PyTorch-style uniform +-1/sqrt(fan_in))."""
    ks = jax.random.split(key, 8)
    f32 = jnp.float32

    def lin(kw, kb, fan_in, shape_w, shape_b):
        bound = 1.0 / jnp.sqrt(fan_in)
        W = jax.random.uniform(kw, shape_w, f32, -bound, bound)
        b = jax.random.uniform(kb, shape_b, f32, -bound, bound)
        return W, b

    W1, b1 = lin(ks[0], ks[1], input_size, (hidden_size, input_size), (hidden_size,))
    W2, b2 = lin(ks[2], ks[3], hidden_size, (1, hidden_size), (1,))
    Wf1, bf1 = lin(ks[4], ks[5], 1, (hidden_size, 1), (hidden_size,))
    Wf2, bf2 = lin(ks[6], ks[7], hidden_size, (1, hidden_size), (1,))

    return dict(W1=W1, b1=b1, W2=W2, b2=b2,
                Wf1=Wf1, bf1=bf1, Wf2=Wf2, bf2=bf2,
                Q=jnp.float32(2.9), delta=jnp.float32(1.0),
                R0=jnp.float32(1.0), R1=jnp.float32(1.0), C1=jnp.float32(1.0))


if __name__ == "__main__":
    # TODO(synk): GaussianNoise is training-only (identity in eval) and the
    # fractional-memory history term in _calculate_Up is zero in the module's
    # simplified forward; neither is modeled here.
    batch, input_size, hidden_size = 8, 4, 32

    key = jax.random.PRNGKey(0)
    kx, kp = jax.random.split(key)
    x = jax.random.normal(kx, (batch, input_size), dtype=jnp.float32)
    params = init_params(kp, input_size, hidden_size)

    prep = prepare_params(params)                 # one-time layout prep
    soc, loss1, loss2 = fsmm_mlp_forward(x, prep)
    jax.block_until_ready((soc, loss1, loss2))

    soc_r, loss1_r, loss2_r = fsmm_mlp_reference(x, params)
    assert jnp.allclose(soc, soc_r, atol=1e-5, rtol=1e-5)
    assert jnp.allclose(loss1, loss1_r, atol=1e-5, rtol=1e-5)
    assert jnp.allclose(loss2, loss2_r, atol=1e-5, rtol=1e-5)

    print("KERNEL_OK")
</pallas_src>

<mosaic_0001>
module attributes {stable_mosaic.version = 11 : i64} {
  func.func @fsmm_kernel(%arg0: i32, %arg1: memref<8xf32, #tpu.memory_space<smem>>, %arg2: memref<4x8xf32, #tpu.memory_space<vmem>>, %arg3: memref<32x4xf32, #tpu.memory_space<vmem>>, %arg4: memref<32x1xf32, #tpu.memory_space<vmem>>, %arg5: memref<32x1xf32, #tpu.memory_space<vmem>>, %arg6: memref<32x1xf32, #tpu.memory_space<vmem>>, %arg7: memref<32x1xf32, #tpu.memory_space<vmem>>, %arg8: memref<32x1xf32, #tpu.memory_space<vmem>>, %arg9: memref<32x1xf32, #tpu.memory_space<vmem>>, %arg10: memref<3x8xf32, #tpu.memory_space<vmem>>) attributes {dimension_semantics = [#tpu.dimension_semantics<parallel>], iteration_bounds = array<i64: 1>, scalar_prefetch = 0 : i64, scratch_operands = 0 : i64, tpu.core_type = #tpu.core_type<tc>, window_params = [{transform_indices = @transform_0, window_bounds = array<i64: 8>}, {transform_indices = @transform_1, window_bounds = array<i64: 4, 8>}, {pipeline_mode = #tpu.pipeline_mode<synchronous>, transform_indices = @transform_2, window_bounds = array<i64: 32, 4>}, {pipeline_mode = #tpu.pipeline_mode<synchronous>, transform_indices = @transform_3, window_bounds = array<i64: 32, 1>}, {pipeline_mode = #tpu.pipeline_mode<synchronous>, transform_indices = @transform_4, window_bounds = array<i64: 32, 1>}, {pipeline_mode = #tpu.pipeline_mode<synchronous>, transform_indices = @transform_5, window_bounds = array<i64: 32, 1>}, {pipeline_mode = #tpu.pipeline_mode<synchronous>, transform_indices = @transform_6, window_bounds = array<i64: 32, 1>}, {pipeline_mode = #tpu.pipeline_mode<synchronous>, transform_indices = @transform_7, window_bounds = array<i64: 32, 1>}, {pipeline_mode = #tpu.pipeline_mode<synchronous>, transform_indices = @transform_8, window_bounds = array<i64: 32, 1>}, {transform_indices = @transform_9, window_bounds = array<i64: 3, 8>}]} {
    %c0 = arith.constant 0 : index
    %0 = memref.load %arg1[%c0] : memref<8xf32, #tpu.memory_space<smem>>
    %c1 = arith.constant 1 : index
    %1 = memref.load %arg1[%c1] : memref<8xf32, #tpu.memory_space<smem>>
    %c2 = arith.constant 2 : index
    %2 = memref.load %arg1[%c2] : memref<8xf32, #tpu.memory_space<smem>>
    %c3 = arith.constant 3 : index
    %3 = memref.load %arg1[%c3] : memref<8xf32, #tpu.memory_space<smem>>
    %c4 = arith.constant 4 : index
    %4 = memref.load %arg1[%c4] : memref<8xf32, #tpu.memory_space<smem>>
    %c0_0 = arith.constant 0 : index
    %c0_1 = arith.constant 0 : index
    %5 = vector.load %arg2[%c0_0, %c0_1] : memref<4x8xf32, #tpu.memory_space<vmem>>, vector<4x8xf32>
    %c0_2 = arith.constant 0 : index
    %c0_3 = arith.constant 0 : index
    %6 = vector.load %arg3[%c0_2, %c0_3] : memref<32x4xf32, #tpu.memory_space<vmem>>, vector<32x4xf32>
    %c0_4 = arith.constant 0 : index
    %c0_5 = arith.constant 0 : index
    %7 = vector.load %arg4[%c0_4, %c0_5] : memref<32x1xf32, #tpu.memory_space<vmem>>, vector<32x1xf32>
    %c0_6 = arith.constant 0 : index
    %c0_7 = arith.constant 0 : index
    %8 = vector.load %arg5[%c0_6, %c0_7] : memref<32x1xf32, #tpu.memory_space<vmem>>, vector<32x1xf32>
    %c0_8 = arith.constant 0 : index
    %c0_9 = arith.constant 0 : index
    %9 = vector.load %arg6[%c0_8, %c0_9] : memref<32x1xf32, #tpu.memory_space<vmem>>, vector<32x1xf32>
    %c0_10 = arith.constant 0 : index
    %c0_11 = arith.constant 0 : index
    %10 = vector.load %arg7[%c0_10, %c0_11] : memref<32x1xf32, #tpu.memory_space<vmem>>, vector<32x1xf32>
    %c0_12 = arith.constant 0 : index
    %c0_13 = arith.constant 0 : index
    %11 = vector.load %arg8[%c0_12, %c0_13] : memref<32x1xf32, #tpu.memory_space<vmem>>, vector<32x1xf32>
    %c0_14 = arith.constant 0 : index
    %c0_15 = arith.constant 0 : index
    %12 = vector.load %arg9[%c0_14, %c0_15] : memref<32x1xf32, #tpu.memory_space<vmem>>, vector<32x1xf32>
    %13 = vector.extract_strided_slice %6 {offsets = [0, 0], sizes = [32, 1], strides = [1, 1]} : vector<32x4xf32> to vector<32x1xf32>
    %14 = vector.extract_strided_slice %5 {offsets = [0, 0], sizes = [1, 8], strides = [1, 1]} : vector<4x8xf32> to vector<1x8xf32>
    %15 = vector.broadcast %13 : vector<32x1xf32> to vector<32x8xf32>
    %16 = vector.broadcast %14 : vector<1x8xf32> to vector<32x8xf32>
    %17 = arith.mulf %15, %16 : vector<32x8xf32>
    %18 = vector.broadcast %7 : vector<32x1xf32> to vector<32x8xf32>
    %19 = arith.addf %18, %17 : vector<32x8xf32>
    %20 = vector.extract_strided_slice %6 {offsets = [0, 1], sizes = [32, 1], strides = [1, 1]} : vector<32x4xf32> to vector<32x1xf32>
    %21 = vector.extract_strided_slice %5 {offsets = [1, 0], sizes = [1, 8], strides = [1, 1]} : vector<4x8xf32> to vector<1x8xf32>
    %22 = vector.broadcast %20 : vector<32x1xf32> to vector<32x8xf32>
    %23 = vector.broadcast %21 : vector<1x8xf32> to vector<32x8xf32>
    %24 = arith.mulf %22, %23 : vector<32x8xf32>
    %25 = arith.addf %19, %24 : vector<32x8xf32>
    %26 = vector.extract_strided_slice %6 {offsets = [0, 2], sizes = [32, 1], strides = [1, 1]} : vector<32x4xf32> to vector<32x1xf32>
    %27 = vector.extract_strided_slice %5 {offsets = [2, 0], sizes = [1, 8], strides = [1, 1]} : vector<4x8xf32> to vector<1x8xf32>
    %28 = vector.broadcast %26 : vector<32x1xf32> to vector<32x8xf32>
    %29 = vector.broadcast %27 : vector<1x8xf32> to vector<32x8xf32>
    %30 = arith.mulf %28, %29 : vector<32x8xf32>
    %31 = arith.addf %25, %30 : vector<32x8xf32>
    %32 = vector.extract_strided_slice %6 {offsets = [0, 3], sizes = [32, 1], strides = [1, 1]} : vector<32x4xf32> to vector<32x1xf32>
    %33 = vector.extract_strided_slice %5 {offsets = [3, 0], sizes = [1, 8], strides = [1, 1]} : vector<4x8xf32> to vector<1x8xf32>
    %34 = vector.broadcast %32 : vector<32x1xf32> to vector<32x8xf32>
    %35 = vector.broadcast %33 : vector<1x8xf32> to vector<32x8xf32>
    %36 = arith.mulf %34, %35 : vector<32x8xf32>
    %37 = arith.addf %31, %36 : vector<32x8xf32>
    %cst = arith.constant 0.000000e+00 : f32
    %38 = vector.broadcast %cst : f32 to vector<32x8xf32>
    %39 = arith.maximumf %37, %38 : vector<32x8xf32>
    %40 = vector.broadcast %8 : vector<32x1xf32> to vector<32x8xf32>
    %41 = arith.mulf %39, %40 : vector<32x8xf32>
    %cst_16 = arith.constant dense<0.000000e+00> : vector<8xf32>
    %42 = vector.multi_reduction <add>, %41, %cst_16 [0] : vector<32x8xf32> to vector<8xf32>
    %43 = vector.shape_cast %42 : vector<8xf32> to vector<1x8xf32>
    %44 = vector.broadcast %3 : f32 to vector<1x8xf32>
    %45 = arith.addf %43, %44 : vector<1x8xf32>
    %cst_17 = arith.constant 0.000000e+00 : f32
    %46 = vector.broadcast %cst_17 : f32 to vector<32x8xf32>
    %47 = arith.cmpf ogt, %37, %46 : vector<32x8xf32>
    %cst_18 = arith.constant 0.000000e+00 : f32
    %48 = vector.shape_cast %9 : vector<32x1xf32> to vector<32x1xf32>
    %49 = vector.broadcast %48 : vector<32x1xf32> to vector<32x8xf32>
    %50 = vector.broadcast %cst_18 : f32 to vector<32x8xf32>
    %51 = arith.select %47, %49, %50 : vector<32x8xi1>, vector<32x8xf32>
    %cst_19 = arith.constant dense<0.000000e+00> : vector<8xf32>
    %52 = vector.multi_reduction <add>, %51, %cst_19 [0] : vector<32x8xf32> to vector<8xf32>
    %53 = vector.shape_cast %52 : vector<8xf32> to vector<1x8xf32>
    %54 = vector.extract_strided_slice %5 {offsets = [0, 0], sizes = [1, 8], strides = [1, 1]} : vector<4x8xf32> to vector<1x8xf32>
    %55 = vector.extract_strided_slice %5 {offsets = [1, 0], sizes = [1, 8], strides = [1, 1]} : vector<4x8xf32> to vector<1x8xf32>
    %56 = vector.broadcast %0 : f32 to vector<1x8xf32>
    %57 = arith.mulf %56, %55 : vector<1x8xf32>
    %58 = arith.addf %57, %53 : vector<1x8xf32>
    %59 = vector.broadcast %45 : vector<1x8xf32> to vector<32x8xf32>
    %60 = vector.broadcast %10 : vector<32x1xf32> to vector<32x8xf32>
    %61 = arith.mulf %59, %60 : vector<32x8xf32>
    %62 = vector.broadcast %11 : vector<32x1xf32> to vector<32x8xf32>
    %63 = arith.addf %61, %62 : vector<32x8xf32>
    %cst_20 = arith.constant 0.000000e+00 : f32
    %64 = vector.broadcast %cst_20 : f32 to vector<32x8xf32>
    %65 = arith.maximumf %63, %64 : vector<32x8xf32>
    %66 = vector.broadcast %12 : vector<32x1xf32> to vector<32x8xf32>
    %67 = arith.mulf %65, %66 : vector<32x8xf32>
    %cst_21 = arith.constant dense<0.000000e+00> : vector<8xf32>
    %68 = vector.multi_reduction <add>, %67, %cst_21 [0] : vector<32x8xf32> to vector<8xf32>
    %69 = vector.shape_cast %68 : vector<8xf32> to vector<1x8xf32>
    %70 = vector.broadcast %4 : f32 to vector<1x8xf32>
    %71 = arith.addf %69, %70 : vector<1x8xf32>
    %72 = vector.broadcast %1 : f32 to vector<1x8xf32>
    %73 = arith.mulf %72, %54 : vector<1x8xf32>
    %74 = arith.subf %71, %73 : vector<1x8xf32>
    %75 = vector.broadcast %2 : f32 to vector<1x8xf32>
    %76 = arith.mulf %75, %55 : vector<1x8xf32>
    %77 = arith.subf %74, %76 : vector<1x8xf32>
    %c0_22 = arith.constant 0 : index
    %c0_23 = arith.constant 0 : index
    %78 = vector.load %arg10[%c0_22, %c0_23] : memref<3x8xf32, #tpu.memory_space<vmem>>, vector<1x8xf32>
    tpu.vector_store %arg10[%c0_22, %c0_23], %45 {strides = array<i32>} : memref<3x8xf32, #tpu.memory_space<vmem>>, vector<1x8xf32>,
    %c1_24 = arith.constant 1 : index
    %c0_25 = arith.constant 0 : index
    %79 = vector.load %arg10[%c1_24, %c0_25] : memref<3x8xf32, #tpu.memory_space<vmem>>, vector<1x8xf32>
    tpu.vector_store %arg10[%c1_24, %c0_25], %58 {strides = array<i32>} : memref<3x8xf32, #tpu.memory_space<vmem>>, vector<1x8xf32>,
    %c2_26 = arith.constant 2 : index
    %c0_27 = arith.constant 0 : index
    %80 = vector.load %arg10[%c2_26, %c0_27] : memref<3x8xf32, #tpu.memory_space<vmem>>, vector<1x8xf32>
    tpu.vector_store %arg10[%c2_26, %c0_27], %77 {strides = array<i32>} : memref<3x8xf32, #tpu.memory_space<vmem>>, vector<1x8xf32>,
    return
  }
  func.func @transform_0(%arg0: i32) -> i32 {
    %c0_i32 = arith.constant 0 : i32
    %c0_i32_0 = arith.constant 0 : i32
    return %c0_i32 : i32
  }
  func.func @transform_1(%arg0: i32) -> (i32, i32) {
    %c0_i32 = arith.constant 0 : i32
    %c0_i32_0 = arith.constant 0 : i32
    return %c0_i32, %arg0 : i32, i32
  }
  func.func @transform_2(%arg0: i32) -> (i32, i32) {
    %c0_i32 = arith.constant 0 : i32
    %c0_i32_0 = arith.constant 0 : i32
    %c0_i32_1 = arith.constant 0 : i32
    return %c0_i32, %c0_i32_0 : i32, i32
  }
  func.func @transform_3(%arg0: i32) -> (i32, i32) {
    %c0_i32 = arith.constant 0 : i32
    %c0_i32_0 = arith.constant 0 : i32
    %c0_i32_1 = arith.constant 0 : i32
    return %c0_i32, %c0_i32_0 : i32, i32
  }
  func.func @transform_4(%arg0: i32) -> (i32, i32) {
    %c0_i32 = arith.constant 0 : i32
    %c0_i32_0 = arith.constant 0 : i32
    %c0_i32_1 = arith.constant 0 : i32
    return %c0_i32, %c0_i32_0 : i32, i32
  }
  func.func @transform_5(%arg0: i32) -> (i32, i32) {
    %c0_i32 = arith.constant 0 : i32
    %c0_i32_0 = arith.constant 0 : i32
    %c0_i32_1 = arith.constant 0 : i32
    return %c0_i32, %c0_i32_0 : i32, i32
  }
  func.func @transform_6(%arg0: i32) -> (i32, i32) {
    %c0_i32 = arith.constant 0 : i32
    %c0_i32_0 = arith.constant 0 : i32
    %c0_i32_1 = arith.constant 0 : i32
    return %c0_i32, %c0_i32_0 : i32, i32
  }
  func.func @transform_7(%arg0: i32) -> (i32, i32) {
    %c0_i32 = arith.constant 0 : i32
    %c0_i32_0 = arith.constant 0 : i32
    %c0_i32_1 = arith.constant 0 : i32
    return %c0_i32, %c0_i32_0 : i32, i32
  }
  func.func @transform_8(%arg0: i32) -> (i32, i32) {
    %c0_i32 = arith.constant 0 : i32
    %c0_i32_0 = arith.constant 0 : i32
    %c0_i32_1 = arith.constant 0 : i32
    return %c0_i32, %c0_i32_0 : i32, i32
  }
  func.func @transform_9(%arg0: i32) -> (i32, i32) {
    %c0_i32 = arith.constant 0 : i32
    %c0_i32_0 = arith.constant 0 : i32
    return %c0_i32, %arg0 : i32, i32
  }
}

</mosaic_0001>

<llo_original>
// kernel: fsmm_mlp_forward.1
$region0: #{fsmm_mlp_forward.1}
  #allocation0 [shape = 'u32[]', space=smem, size = 0x4, offset = 0x4, fixed_abs, tag = 'smem constant byte address 0x4 - core index']
  #allocation1 [shape = 'u32[72,128]{1,0:T(1,128)}', space=vmem, size = 0x9000, scoped, tag = 'internal scratch']
  %s0 = inlined_call_operand.vmem [shape: f32[8], index: 0, kind: input, shape index: {}]
  %s1 = inlined_call_operand.vmem [shape: f32[4,8], index: 1, kind: input, shape index: {}]
  %s2 = inlined_call_operand.vmem [shape: f32[32,4], index: 2, kind: input, shape index: {}]
  %s3 = inlined_call_operand.vmem [shape: f32[32,1], index: 3, kind: input, shape index: {}]
  %s4 = inlined_call_operand.vmem [shape: f32[32,1], index: 4, kind: input, shape index: {}]
  %s5 = inlined_call_operand.vmem [shape: f32[32,1], index: 5, kind: input, shape index: {}]
  %s6 = inlined_call_operand.vmem [shape: f32[32,1], index: 6, kind: input, shape index: {}]
  %s7 = inlined_call_operand.vmem [shape: f32[32,1], index: 7, kind: input, shape index: {}]
  %s8 = inlined_call_operand.vmem [shape: f32[32,1], index: 8, kind: input, shape index: {}]
  %s9 = inlined_call_operand.vmem [shape: f32[3,8], index: 9, kind: output, shape index: {}]
  %s10 = sld [smem:[#allocation0]]
  $region50: #{fsmm_mlp_forward.1} parent=0
    _
  %s12 = ssub.s32 1, %s10
  %s13 = scalar_select 0, %s12, %s10
  $region1: #{fsmm_mlp_forward.1} parent=0
    #allocation2 [shape = 'u8[512]{0}', space=smem, size = 0x200, scoped, tag = 'input window, operand 0, single buffered']
    #allocation3 [shape = 's32[1]{0}', space=sflag, size = 0x4, scoped, tag = 'scoped memory for fsmm_mlp_forward.1']
    %14 = vsyncpa [#allocation3], 0
    // Predicated region
    $region2: #{fsmm_mlp_forward.1} parent=1 // pred_check
      _
    $region3: #{fsmm_mlp_forward.1} parent=1 // pred_check_branch
      %16 = sbr.rel (0) target = $region5
    $region4: #{fsmm_mlp_forward.1} parent=1 // pred_region
      %18 = vsyncadd [#allocation3], 0
      %s20 = sshll.u32 %s0, 4
      %s21 = int_to_ptr.vmem [resolvable:$true] %s20
      %23 = dma.vmem_to_smem %s21, 16, [#allocation2], [#allocation3]
    $region5: #{fsmm_mlp_forward.1} parent=1 // pred_fallthru
      _
    // Predicated region
    $region6: #{fsmm_mlp_forward.1} parent=1 // pred_check
      _
    $region7: #{fsmm_mlp_forward.1} parent=1 // pred_check_branch
      %25 = sbr.rel (0) target = $region9
    $region8: #{fsmm_mlp_forward.1} parent=1 // pred_region
      _
    $region9: #{fsmm_mlp_forward.1} parent=1 // pred_fallthru
      _
    // Predicated region
    $region10: #{fsmm_mlp_forward.1} parent=1 // pred_check
      _
    $region11: #{fsmm_mlp_forward.1} parent=1 // pred_check_branch
      %27 = sbr.rel (0) target = $region13
    $region12: #{fsmm_mlp_forward.1} parent=1 // pred_region
      _
    $region13: #{fsmm_mlp_forward.1} parent=1 // pred_fallthru
      _
    // Predicated region
    $region14: #{fsmm_mlp_forward.1} parent=1 // pred_check
      _
    $region15: #{fsmm_mlp_forward.1} parent=1 // pred_check_branch
      %29 = sbr.rel (0) target = $region17
    $region16: #{fsmm_mlp_forward.1} parent=1 // pred_region
      _
    $region17: #{fsmm_mlp_forward.1} parent=1 // pred_fallthru
      _
    // Predicated region
    $region18: #{fsmm_mlp_forward.1} parent=1 // pred_check
      _
    $region19: #{fsmm_mlp_forward.1} parent=1 // pred_check_branch
      %31 = sbr.rel (0) target = $region21
    $region20: #{fsmm_mlp_forward.1} parent=1 // pred_region
      _
    $region21: #{fsmm_mlp_forward.1} parent=1 // pred_fallthru
      _
    // Predicated region
    $region22: #{fsmm_mlp_forward.1} parent=1 // pred_check
      _
    $region23: #{fsmm_mlp_forward.1} parent=1 // pred_check_branch
      %33 = sbr.rel (0) target = $region25
    $region24: #{fsmm_mlp_forward.1} parent=1 // pred_region
      _
    $region25: #{fsmm_mlp_forward.1} parent=1 // pred_fallthru
      _
    // Predicated region
    $region26: #{fsmm_mlp_forward.1} parent=1 // pred_check
      _
    $region27: #{fsmm_mlp_forward.1} parent=1 // pred_check_branch
      %35 = sbr.rel (0) target = $region29
    $region28: #{fsmm_mlp_forward.1} parent=1 // pred_region
      _
    $region29: #{fsmm_mlp_forward.1} parent=1 // pred_fallthru
      _
    // Predicated region
    $region30: #{fsmm_mlp_forward.1} parent=1 // pred_check
      _
    $region31: #{fsmm_mlp_forward.1} parent=1 // pred_check_branch
      %37 = sbr.rel (0) target = $region33
    $region32: #{fsmm_mlp_forward.1} parent=1 // pred_region
      _
    $region33: #{fsmm_mlp_forward.1} parent=1 // pred_fallthru
      _
    // Predicated region
    $region34: #{fsmm_mlp_forward.1} parent=1 // pred_check
      _
    $region35: #{fsmm_mlp_forward.1} parent=1 // pred_check_branch
      %39 = sbr.rel (0) target = $region37
    $region36: #{fsmm_mlp_forward.1} parent=1 // pred_region
      _
    $region37: #{fsmm_mlp_forward.1} parent=1 // pred_fallthru
      _
    // Predicated region
    $region38: #{fsmm_mlp_forward.1} parent=1 // pred_check
      _
    $region39: #{fsmm_mlp_forward.1} parent=1 // pred_check_branch
      %41 = sbr.rel (0) target = $region41
    $region40: #{fsmm_mlp_forward.1} parent=1 // pred_region
      %43 = dma.done [#allocation3], 16
    $region41: #{fsmm_mlp_forward.1} parent=1 // pred_fallthru
      _
    %44 = sfence
    %s45 = sld [smem:[#allocation2]]
    %s46 = sld [smem:[#allocation2 + $0x1]]
    %s47 = sld [smem:[#allocation2 + $0x2]]
    %s48 = sld [smem:[#allocation2 + $0x3]]
    %s49 = sld [smem:[#allocation2 + $0x4]]
    %v50 = vld [vmem:[%s1] sm:$0xf]
    %v51 = vld [vmem:[%s2] sm:$0xff]
    %v52 = vld [vmem:[%s2 + $0x8] sm:$0xff]
    %v53 = vld [vmem:[%s2 + $0x10] sm:$0xff]
    %v54 = vld [vmem:[%s2 + $0x18] sm:$0xff]
    %v55 = vld [vmem:[%s3] sm:$0xff]
    %v56 = vld [vmem:[%s3 + $0x8] sm:$0xff]
    %v57 = vld [vmem:[%s3 + $0x10] sm:$0xff]
    %v58 = vld [vmem:[%s3 + $0x18] sm:$0xff]
    %v59 = vld [vmem:[%s4] sm:$0xff]
    %v60 = vld [vmem:[%s4 + $0x8] sm:$0xff]
    %v61 = vld [vmem:[%s4 + $0x10] sm:$0xff]
    %v62 = vld [vmem:[%s4 + $0x18] sm:$0xff]
    %v63 = vld [vmem:[%s5] sm:$0xff]
    %v64 = vld [vmem:[%s5 + $0x8] sm:$0xff]
    %v65 = vld [vmem:[%s5 + $0x10] sm:$0xff]
    %v66 = vld [vmem:[%s5 + $0x18] sm:$0xff]
    %v67 = vld [vmem:[%s6] sm:$0xff]
    %v68 = vld [vmem:[%s6 + $0x8] sm:$0xff]
    %v69 = vld [vmem:[%s6 + $0x10] sm:$0xff]
    %v70 = vld [vmem:[%s6 + $0x18] sm:$0xff]
    %v71 = vld [vmem:[%s7] sm:$0xff]
    %v72 = vld [vmem:[%s7 + $0x8] sm:$0xff]
    %v73 = vld [vmem:[%s7 + $0x10] sm:$0xff]
    %v74 = vld [vmem:[%s7 + $0x18] sm:$0xff]
    %v75 = vld [vmem:[%s8] sm:$0xff]
    %v76 = vld [vmem:[%s8 + $0x8] sm:$0xff]
    %v77 = vld [vmem:[%s8 + $0x10] sm:$0xff]
    %v78 = vld [vmem:[%s8 + $0x18] sm:$0xff]
    %80 = vset.pattern.permute.xlu0 0
    %81 = vperm.xlu0 %80, %v51
    %v82 = vpop.permute.xlu0 %81
    %85 = vset.pattern.permute.xlu0 0
    %86 = vperm.xlu0 %85, %v52
    %v87 = vpop.permute.xlu0 %86
    %90 = vset.pattern.permute.xlu0 0
    %91 = vperm.xlu0 %90, %v53
    %v92 = vpop.permute.xlu0 %91
    %95 = vset.pattern.permute.xlu0 0
    %96 = vperm.xlu0 %95, %v54
    %v97 = vpop.permute.xlu0 %96
    %v99 = vperm.slane %v50, 0
    %v100 = vmul.f32 %v82, %v99
    %v101 = vmul.f32 %v87, %v99
    %v102 = vmul.f32 %v92, %v99
    %v103 = vmul.f32 %v97, %v99
    %105 = vset.pattern.permute.xlu0 0
    %106 = vperm.xlu0 %105, %v55
    %v107 = vpop.permute.xlu0 %106
    %110 = vset.pattern.permute.xlu0 0
    %111 = vperm.xlu0 %110, %v56
    %v112 = vpop.permute.xlu0 %111
    %115 = vset.pattern.permute.xlu0 0
    %116 = vperm.xlu0 %115, %v57
    %v117 = vpop.permute.xlu0 %116
    %120 = vset.pattern.permute.xlu0 0
    %121 = vperm.xlu0 %120, %v58
    %v122 = vpop.permute.xlu0 %121
    %v124 = vadd.f32 %v107, %v100
    %v125 = vadd.f32 %v112, %v101
    %v126 = vadd.f32 %v117, %v102
    %v127 = vadd.f32 %v122, %v103
    %128 = vset.pattern.permute.xlu0 1
    %129 = vperm.xlu0 %128, %v51
    %v130 = vpop.permute.xlu0 %129
    %132 = vset.pattern.permute.xlu0 1
    %133 = vperm.xlu0 %132, %v52
    %v134 = vpop.permute.xlu0 %133
    %136 = vset.pattern.permute.xlu0 1
    %137 = vperm.xlu0 %136, %v53
    %v138 = vpop.permute.xlu0 %137
    %140 = vset.pattern.permute.xlu0 1
    %141 = vperm.xlu0 %140, %v54
    %v142 = vpop.permute.xlu0 %141
    %v144 = vperm.slane %v50, 1
    %v145 = vmul.f32 %v130, %v144
    %v146 = vmul.f32 %v134, %v144
    %v147 = vmul.f32 %v138, %v144
    %v148 = vmul.f32 %v142, %v144
    %v149 = vadd.f32 %v124, %v145
    %v150 = vadd.f32 %v125, %v146
    %v151 = vadd.f32 %v126, %v147
    %v152 = vadd.f32 %v127, %v148
    %153 = vset.pattern.permute.xlu0 2
    %154 = vperm.xlu0 %153, %v51
    %v155 = vpop.permute.xlu0 %154
    %157 = vset.pattern.permute.xlu0 2
    %158 = vperm.xlu0 %157, %v52
    %v159 = vpop.permute.xlu0 %158
    %161 = vset.pattern.permute.xlu0 2
    %162 = vperm.xlu0 %161, %v53
    %v163 = vpop.permute.xlu0 %162
    %165 = vset.pattern.permute.xlu0 2
    %166 = vperm.xlu0 %165, %v54
    %v167 = vpop.permute.xlu0 %166
    %v169 = vperm.slane %v50, 2
    %v170 = vmul.f32 %v155, %v169
    %v171 = vmul.f32 %v159, %v169
    %v172 = vmul.f32 %v163, %v169
    %v173 = vmul.f32 %v167, %v169
    %v174 = vadd.f32 %v149, %v170
    %v175 = vadd.f32 %v150, %v171
    %v176 = vadd.f32 %v151, %v172
    %v177 = vadd.f32 %v152, %v173
    %178 = vset.pattern.permute.xlu0 3
    %179 = vperm.xlu0 %178, %v51
    %v180 = vpop.permute.xlu0 %179
    %182 = vset.pattern.permute.xlu0 3
    %183 = vperm.xlu0 %182, %v52
    %v184 = vpop.permute.xlu0 %183
    %186 = vset.pattern.permute.xlu0 3
    %187 = vperm.xlu0 %186, %v53
    %v188 = vpop.permute.xlu0 %187
    %190 = vset.pattern.permute.xlu0 3
    %191 = vperm.xlu0 %190, %v54
    %v192 = vpop.permute.xlu0 %191
    %v194 = vperm.slane %v50, 3
    %v195 = vmul.f32 %v180, %v194
    %v196 = vmul.f32 %v184, %v194
    %v197 = vmul.f32 %v188, %v194
    %v198 = vmul.f32 %v192, %v194
    %v199 = vadd.f32 %v174, %v195
    %v200 = vadd.f32 %v175, %v196
    %v201 = vadd.f32 %v176, %v197
    %v202 = vadd.f32 %v177, %v198
    %v203 = vmax.f32 %v199, 0.0
    %v204 = vmax.f32 %v200, 0.0
    %v205 = vmax.f32 %v201, 0.0
    %v206 = vmax.f32 %v202, 0.0
    %208 = vset.pattern.permute.xlu0 0
    %209 = vperm.xlu0 %208, %v59
    %v210 = vpop.permute.xlu0 %209
    %213 = vset.pattern.permute.xlu0 0
    %214 = vperm.xlu0 %213, %v60
    %v215 = vpop.permute.xlu0 %214
    %218 = vset.pattern.permute.xlu0 0
    %219 = vperm.xlu0 %218, %v61
    %v220 = vpop.permute.xlu0 %219
    %223 = vset.pattern.permute.xlu0 0
    %224 = vperm.xlu0 %223, %v62
    %v225 = vpop.permute.xlu0 %224
    %v227 = vmul.f32 %v203, %v210
    %v228 = vmul.f32 %v204, %v215
    %v229 = vmul.f32 %v205, %v220
    %v230 = vmul.f32 %v206, %v225
    %vm231 = vcmask 64512
    %v232 = vsel %vm231, %v227, 0.0
    %v233 = vsel %vm231, %v228, 0.0
    %v234 = vadd.f32 %v232, %v233
    %v235 = vsel %vm231, %v229, 0.0
    %v236 = vadd.f32 %v234, %v235
    %v237 = vsel %vm231, %v230, 0.0
    %v238 = vadd.f32 %v236, %v237
    %v239 = vrot.slane %v238, 4
    %v240 = vadd.f32 %v238, %v239
    %v241 = vrot.slane %v240, 2
    %v242 = vadd.f32 %v240, %v241
    %v243 = vrot.slane %v242, 1
    %v244 = vadd.f32 %v242, %v243
    %v245 = vstv %s48
    %v246 = vadd.f32 %v244, %v245
    %vm247 = vcmp.gt.f32.partialorder %v199, 0.0
    %vm248 = vcmp.gt.f32.partialorder %v200, 0.0
    %vm249 = vcmp.gt.f32.partialorder %v201, 0.0
    %vm250 = vcmp.gt.f32.partialorder %v202, 0.0
    %252 = vset.pattern.permute.xlu0 0
    %253 = vperm.xlu0 %252, %v63
    %v254 = vpop.permute.xlu0 %253
    %257 = vset.pattern.permute.xlu0 0
    %258 = vperm.xlu0 %257, %v64
    %v259 = vpop.permute.xlu0 %258
    %262 = vset.pattern.permute.xlu0 0
    %263 = vperm.xlu0 %262, %v65
    %v264 = vpop.permute.xlu0 %263
    %267 = vset.pattern.permute.xlu0 0
    %268 = vperm.xlu0 %267, %v66
    %v269 = vpop.permute.xlu0 %268
    %v271 = vsel %vm247, %v254, 0.0
    %v272 = vsel %vm248, %v259, 0.0
    %v273 = vsel %vm249, %v264, 0.0
    %v274 = vsel %vm250, %v269, 0.0
    %v275 = vsel %vm231, %v271, 0.0
    %v276 = vsel %vm231, %v272, 0.0
    %v277 = vadd.f32 %v275, %v276
    %v278 = vsel %vm231, %v273, 0.0
    %v279 = vadd.f32 %v277, %v278
    %v280 = vsel %vm231, %v274, 0.0
    %v281 = vadd.f32 %v279, %v280
    %v282 = vrot.slane %v281, 4
    %v283 = vadd.f32 %v281, %v282
    %v284 = vrot.slane %v283, 2
    %v285 = vadd.f32 %v283, %v284
    %v286 = vrot.slane %v285, 1
    %v287 = vadd.f32 %v285, %v286
    %v288 = vstv %s45
    %v289 = vmul.f32 %v288, %v50
    %v290 = vadd.f32 %v289, %v287
    %292 = vset.pattern.permute.xlu0 0
    %293 = vperm.xlu0 %292, %v67
    %v294 = vpop.permute.xlu0 %293
    %297 = vset.pattern.permute.xlu0 0
    %298 = vperm.xlu0 %297, %v68
    %v299 = vpop.permute.xlu0 %298
    %302 = vset.pattern.permute.xlu0 0
    %303 = vperm.xlu0 %302, %v69
    %v304 = vpop.permute.xlu0 %303
    %307 = vset.pattern.permute.xlu0 0
    %308 = vperm.xlu0 %307, %v70
    %v309 = vpop.permute.xlu0 %308
    %v311 = vmul.f32 %v246, %v294
    %v312 = vmul.f32 %v246, %v299
    %v313 = vmul.f32 %v246, %v304
    %v314 = vmul.f32 %v246, %v309
    %316 = vset.pattern.permute.xlu0 0
    %317 = vperm.xlu0 %316, %v71
    %v318 = vpop.permute.xlu0 %317
    %321 = vset.pattern.permute.xlu0 0
    %322 = vperm.xlu0 %321, %v72
    %v323 = vpop.permute.xlu0 %322
    %326 = vset.pattern.permute.xlu0 0
    %327 = vperm.xlu0 %326, %v73
    %v328 = vpop.permute.xlu0 %327
    %331 = vset.pattern.permute.xlu0 0
    %332 = vperm.xlu0 %331, %v74
    %v333 = vpop.permute.xlu0 %332
    %v335 = vadd.f32 %v311, %v318
    %v336 = vadd.f32 %v312, %v323
    %v337 = vadd.f32 %v313, %v328
    %v338 = vadd.f32 %v314, %v333
    %v339 = vmax.f32 %v335, 0.0
    %v340 = vmax.f32 %v336, 0.0
    %v341 = vmax.f32 %v337, 0.0
    %v342 = vmax.f32 %v338, 0.0
    %344 = vset.pattern.permute.xlu0 0
    %345 = vperm.xlu0 %344, %v75
    %v346 = vpop.permute.xlu0 %345
    %349 = vset.pattern.permute.xlu0 0
    %350 = vperm.xlu0 %349, %v76
    %v351 = vpop.permute.xlu0 %350
    %354 = vset.pattern.permute.xlu0 0
    %355 = vperm.xlu0 %354, %v77
    %v356 = vpop.permute.xlu0 %355
    %359 = vset.pattern.permute.xlu0 0
    %360 = vperm.xlu0 %359, %v78
    %v361 = vpop.permute.xlu0 %360
    %v363 = vmul.f32 %v339, %v346
    %v364 = vmul.f32 %v340, %v351
    %v365 = vmul.f32 %v341, %v356
    %v366 = vmul.f32 %v342, %v361
    %v367 = vsel %vm231, %v363, 0.0
    %v368 = vsel %vm231, %v364, 0.0
    %v369 = vadd.f32 %v367, %v368
    %v370 = vsel %vm231, %v365, 0.0
    %v371 = vadd.f32 %v369, %v370
    %v372 = vsel %vm231, %v366, 0.0
    %v373 = vadd.f32 %v371, %v372
    %v374 = vrot.slane %v373, 4
    %v375 = vadd.f32 %v373, %v374
    %v376 = vrot.slane %v375, 2
    %v377 = vadd.f32 %v375, %v376
    %v378 = vrot.slane %v377, 1
    %v379 = vadd.f32 %v377, %v378
    %v380 = vstv %s49
    %v381 = vadd.f32 %v379, %v380
    %v382 = vstv %s46
    %v383 = vmul.f32 %v382, %v50
    %v384 = vsub.f32 %v381, %v383
    %v385 = vstv %s47
    %v386 = vmul.f32 %v385, %v50
    %v388 = vrot.slane %v386, 1
    %v390 = vsub.f32 %v384, %v388
    %vm391 = vcmask 57344
    %392 = vst.msk [vmem:[%s9] sm:$0x1] %vm391, %v246
    %vm393 = vcmask 58369
    %394 = vst.msk [vmem:[%s9] sm:$0x2] %vm393, %v290
    %395 = vst.msk [vmem:[%s9 + $0x2] sm:$0x1] %vm391, %v390
    // Predicated region
    $region42: #{fsmm_mlp_forward.1} parent=1 // pred_check
      _
    $region43: #{fsmm_mlp_forward.1} parent=1 // pred_check_branch
      %397 = sbr.rel (0) target = $region45
    $region44: #{fsmm_mlp_forward.1} parent=1 // pred_region
      _
    $region45: #{fsmm_mlp_forward.1} parent=1 // pred_fallthru
      _
    // Predicated region
    $region46: #{fsmm_mlp_forward.1} parent=1 // pred_check
      _
    $region47: #{fsmm_mlp_forward.1} parent=1 // pred_check_branch
      %399 = sbr.rel (0) target = $region49
    $region48: #{fsmm_mlp_forward.1} parent=1 // pred_region
      _
    $region49: #{fsmm_mlp_forward.1} parent=1 // pred_fallthru
      _
    %400 = vsyncpa [#allocation3], 1

</llo_original>
